<compile_context>
chip_gen: v7x
topology: tpu7x:2x2x1
jax: 0.10.0
libtpu: 0.0.40
codegen_flags: <defaults>
</compile_context>

<pallas_src>
import jax
import jax.numpy as jnp
from jax.experimental import pallas as pl
from jax.experimental.pallas import tpu as pltpu


_LANES = 128          # vreg lane width; identical on v5e / v6e / v7x.
_SUBLANES = 8         # fp32 sublane count per vreg.
_MAX_TILE_ROWS = 512  # 512 x 128 fp32 = 256 KiB/block -> ~85% of HBM roofline.


def _copy_kernel(x_ref, o_ref):
    # Straight lane-dense tile copy; the grid + BlockSpec double-buffering
    # turns this into an overlapped HBM -> VMEM -> HBM stream.
    o_ref[...] = x_ref[...]


def _pack_lane_dense(flat):
    """Pad a flat vector and reshape to a grid-friendly (rows, 128) slab.

    Rows are rounded up to a multiple of 8 (full sublanes); if more than one
    grid step is needed, rows are further rounded to a multiple of the tile
    height so every block is full-extent (no masked partial blocks).
    """
    n = flat.size
    rows = pl.cdiv(n, _LANES)
    rows = ((rows + _SUBLANES - 1) // _SUBLANES) * _SUBLANES
    if rows > _MAX_TILE_ROWS:
        rows = ((rows + _MAX_TILE_ROWS - 1) // _MAX_TILE_ROWS) * _MAX_TILE_ROWS
    padded = rows * _LANES
    if padded != n:
        flat = jnp.pad(flat, (0, padded - n))
    return flat.reshape(rows, _LANES)


def _tiled_lane_dense_copy(slab):
    """One pallas_call: 1-D row grid over a lane-dense (rows, 128) slab."""
    rows, lanes = slab.shape
    tile_rows = min(rows, _MAX_TILE_ROWS)
    grid = rows // tile_rows  # exact by construction in _pack_lane_dense
    nbytes = slab.size * slab.dtype.itemsize
    return pl.pallas_call(
        _copy_kernel,
        out_shape=jax.ShapeDtypeStruct(slab.shape, slab.dtype),
        grid=(grid,),
        in_specs=[pl.BlockSpec((tile_rows, lanes), lambda i: (i, 0))],
        out_specs=pl.BlockSpec((tile_rows, lanes), lambda i: (i, 0)),
        compiler_params=pltpu.CompilerParams(
            dimension_semantics=("parallel",)),
        cost_estimate=pl.CostEstimate(
            flops=0, transcendentals=0, bytes_accessed=2 * nbytes),
    )(slab)


def pan_3branch_materialized(x1, x2, x3):
    """Optional materialized copy of the three branches via ONE Pallas call."""
    branches = (x1, x2, x3)
    dtypes = {jnp.dtype(x.dtype) for x in branches}

    if len(dtypes) == 1:
        # Single uniform slab: one launch, one block shape for all branches.
        flat = jnp.concatenate([x.reshape(-1) for x in branches])
        out_flat = _tiled_lane_dense_copy(_pack_lane_dense(flat)).reshape(-1)
        outs, off = [], 0
        for x in branches:
            outs.append(out_flat[off:off + x.size].reshape(x.shape))
            off += x.size
        return outs

    # Mixed dtypes: fall back to one tiled lane-dense copy per branch.
    return [
        _tiled_lane_dense_copy(_pack_lane_dense(x.reshape(-1)))
        .reshape(-1)[: x.size].reshape(x.shape)
        for x in branches
    ]


class PAN3BranchPallas:
    """JAX/Pallas equivalent of the PyTorch PAN_3branch module."""

    def __init__(self, in_branch_channels, out_branch_channels,
                 activation=None, bias=True):
        # The reference module defines no parameters and performs no compute
        # in forward; it only stores the channel configs.
        self.in_branch_channels = in_branch_channels
        self.out_branch_channels = out_branch_channels
        # activation / bias are unused in the reference forward.

    def __call__(self, x1, x2, x3, materialize=False):
        if not materialize:
            # Reference forward semantics: pure identity.  Returning the
            # inputs directly is the fastest correct implementation (zero HBM
            # traffic, zero kernel launches) on every TPU generation.
            return [x1, x2, x3]
        # Optional: materialize fresh buffers via a single fused, tiled,
        # lane-dense Pallas copy.
        return pan_3branch_materialized(x1, x2, x3)


if __name__ == "__main__":
    key = jax.random.PRNGKey(0)
    k1, k2, k3 = jax.random.split(key, 3)

    # Small NCHW feature maps, typical pyramid-style shapes per branch.
    x1 = jax.random.normal(k1, (2, 4, 16, 16), dtype=jnp.float32)
    x2 = jax.random.normal(k2, (2, 8, 8, 8), dtype=jnp.float32)
    x3 = jax.random.normal(k3, (2, 16, 4, 4), dtype=jnp.float32)

    pan = PAN3BranchPallas(
        in_branch_channels=[4, 8, 16],
        out_branch_channels=[4, 8, 16],
        activation=None,
        bias=True,
    )

    # Default (fastest) path: pure pass-through, exactly the reference forward.
    outs = pan(x1, x2, x3)
    outs = [jax.block_until_ready(o) for o in outs]
    for o, x in zip(outs, (x1, x2, x3)):
        assert o.shape == x.shape and o.dtype == x.dtype
        assert bool(jnp.all(o == x))

    # Materialized path: single fused, tiled, lane-dense Pallas copy kernel.
    mats = pan(x1, x2, x3, materialize=True)
    mats = [jax.block_until_ready(o) for o in mats]
    for o, x in zip(mats, (x1, x2, x3)):
        assert o.shape == x.shape and o.dtype == x.dtype
        assert bool(jnp.all(o == x))

    print("KERNEL_OK")
</pallas_src>

<mosaic_0001>
module attributes {stable_mosaic.version = 11 : i64} {
  func.func @_copy_kernel(%arg0: i32, %arg1: memref<32x128xf32, #tpu.memory_space<vmem>>, %arg2: memref<32x128xf32, #tpu.memory_space<vmem>>) attributes {dimension_semantics = [#tpu.dimension_semantics<parallel>], iteration_bounds = array<i64: 1>, scalar_prefetch = 0 : i64, scratch_operands = 0 : i64, tpu.core_type = #tpu.core_type<tc>, window_params = [{transform_indices = @transform_0, window_bounds = array<i64: 32, 128>}, {transform_indices = @transform_1, window_bounds = array<i64: 32, 128>}]} {
    %c0 = arith.constant 0 : index
    %c0_0 = arith.constant 0 : index
    %0 = vector.load %arg1[%c0, %c0_0] : memref<32x128xf32, #tpu.memory_space<vmem>>, vector<32x128xf32>
    %c0_1 = arith.constant 0 : index
    %c0_2 = arith.constant 0 : index
    %1 = vector.load %arg2[%c0_1, %c0_2] : memref<32x128xf32, #tpu.memory_space<vmem>>, vector<32x128xf32>
    tpu.vector_store %arg2[%c0_1, %c0_2], %0 {strides = array<i32>} : memref<32x128xf32, #tpu.memory_space<vmem>>, vector<32x128xf32>,
    return
  }
  func.func @transform_0(%arg0: i32) -> (i32, i32) {
    %c0_i32 = arith.constant 0 : i32
    %c0_i32_0 = arith.constant 0 : i32
    return %arg0, %c0_i32 : i32, i32
  }
  func.func @transform_1(%arg0: i32) -> (i32, i32) {
    %c0_i32 = arith.constant 0 : i32
    %c0_i32_0 = arith.constant 0 : i32
    return %arg0, %c0_i32 : i32, i32
  }
}

</mosaic_0001>

<llo_original>
// kernel: tpu_custom_call.1
$region0: #{tpu_custom_call.1}
  #allocation0 [shape = 'u32[]', space=smem, size = 0x4, offset = 0x4, fixed_abs, tag = 'smem constant byte address 0x4 - core index']
  #allocation1 [shape = 'u32[144,128]{1,0:T(1,128)}', space=vmem, size = 0x12000, scoped, tag = 'internal scratch']
  %s0 = inlined_call_operand.hbm [shape: f32[32,128], index: 0, kind: input, shape index: {}]
  %s1 = inlined_call_operand.hbm [shape: f32[32,128], index: 1, kind: output, shape index: {}]
  %s2 = sld [smem:[#allocation0]]
  $region18: #{tpu_custom_call.1} parent=0
    _
  %s4 = ssub.s32 1, %s2
  %s5 = scalar_select 0, %s4, %s2
  $region1: #{tpu_custom_call.1} parent=0
    #allocation2 [shape = 'u8[16384]{0}', space=vmem, size = 0x4000, scoped, tag = 'input window, operand 0, single buffered']
    #allocation3 [shape = 's32[1]{0}', space=sflag, size = 0x4, scoped, tag = 'scoped memory for tpu_custom_call.1']
    #allocation4 [shape = 's32[1]{0}', space=sflag, size = 0x4, scoped, tag = 'scoped memory for tpu_custom_call.1']
    #allocation5 [shape = 'u8[16384]{0}', space=vmem, size = 0x4000, scoped, tag = 'output window, operand 0, single buffered']
    %6 = vsyncpa [#allocation3], 0
    %7 = vsyncpa [#allocation4], 0
    // Predicated region
    $region2: #{tpu_custom_call.1} parent=1 // pred_check
      _
    $region3: #{tpu_custom_call.1} parent=1 // pred_check_branch
      %9 = sbr.rel (0) target = $region5
    $region4: #{tpu_custom_call.1} parent=1 // pred_region
      %s11 = ssub.s32 512, 512
      %12 = vsyncadd [#allocation3], %s11
      %s13 = sshll.u32 [#allocation2], 4
      %s14 = int_to_ptr.vmem [resolvable:$true] %s13
      %19 = dma.hbm_to_vmem [thread:$0]  %s0, 512, %s14, [#allocation3], 128, 128, 8
    $region5: #{tpu_custom_call.1} parent=1 // pred_fallthru
      _
    // Predicated region
    $region6: #{tpu_custom_call.1} parent=1 // pred_check
      _
    $region7: #{tpu_custom_call.1} parent=1 // pred_check_branch
      %21 = sbr.rel (0) target = $region9
    $region8: #{tpu_custom_call.1} parent=1 // pred_region
      %22 = dma.done [#allocation3], 512
    $region9: #{tpu_custom_call.1} parent=1 // pred_fallthru
      _
    %v23 = vld [vmem:[#allocation2] sm:$0xff]
    %v24 = vld [vmem:[#allocation2 + $0x8] sm:$0xff]
    %v25 = vld [vmem:[#allocation2 + $0x10] sm:$0xff]
    %v26 = vld [vmem:[#allocation2 + $0x18] sm:$0xff]
    %27 = vst [vmem:[#allocation5] sm:$0xff] %v23
    %28 = vst [vmem:[#allocation5 + $0x8] sm:$0xff] %v24
    %29 = vst [vmem:[#allocation5 + $0x10] sm:$0xff] %v25
    %30 = vst [vmem:[#allocation5 + $0x18] sm:$0xff] %v26
    // Predicated region
    $region10: #{tpu_custom_call.1} parent=1 // pred_check
      _
    $region11: #{tpu_custom_call.1} parent=1 // pred_check_branch
      %32 = sbr.rel (0) target = $region13
    $region12: #{tpu_custom_call.1} parent=1 // pred_region
      %s34 = ssub.s32 512, 512
      %35 = vsyncadd [#allocation4], %s34
      %s36 = sshll.u32 [#allocation5], 4
      %s37 = int_to_ptr.vmem [resolvable:$true] %s36
      %42 = dma.vmem_to_hbm [thread:$0]  %s37, 512, %s1, [#allocation4], 128, 128, 8
    $region13: #{tpu_custom_call.1} parent=1 // pred_fallthru
      _
    // Predicated region
    $region14: #{tpu_custom_call.1} parent=1 // pred_check
      _
    $region15: #{tpu_custom_call.1} parent=1 // pred_check_branch
      %44 = sbr.rel (0) target = $region17
    $region16: #{tpu_custom_call.1} parent=1 // pred_region
      %45 = dma.done [#allocation4], 512
    $region17: #{tpu_custom_call.1} parent=1 // pred_fallthru
      _
    %46 = vsyncpa [#allocation3], 1
    %47 = vsyncpa [#allocation4], 1

</llo_original>
